<compile_context>
chip_gen: v7x
topology: tpu7x:2x2x1
jax: 0.10.0
libtpu: 0.0.40
codegen_flags: <defaults>
</compile_context>

<pallas_src>
import jax
import jax.numpy as jnp
from jax.experimental import pallas as pl
from jax.experimental.pallas import tpu as pltpu

_LANE = 128          # lane-dense last dim (full vreg width)
_TILE_ROWS = 4096    # 4096 * 128 * 4B = 2 MiB per tile


def _pixelcnn_kernel(w_ref, b_ref, x_ref, o_ref):
    # w_ref, b_ref: (1,) scalars in SMEM.  x_ref / o_ref: (tile_rows, 128) VMEM tile.
    w = w_ref[0]
    b = b_ref[0]
    x = x_ref[...]
    # Sigmoid: exp runs on the EUP; the f32 divide is negligible for this
    # memory-bound kernel and keeps exact PyTorch semantics (an approx EUP
    # reciprocal would add ~1e-4 error for no measurable wall-clock gain here).
    s = 1.0 / (1.0 + jnp.exp(-x))
    o_ref[...] = s * w + b               # 1x1 conv, 1 in / 1 out channel


def pixelcnn_forward(x, weight, bias, *, lane=_LANE, tile_rows=_TILE_ROWS):
    """x: (N, 1, H, W) float32.  weight: (1, 1, 1, 1).  bias: (1,)."""
    N, C, H, W = x.shape
    assert C == 1, "PixelCNN variant uses a single channel"
    total = N * C * H * W

    # Flatten to a lane-dense slab (rows, lane); pad the tail if needed.
    flat = x.reshape(total)
    pad_elems = (-total) % lane
    if pad_elems:
        flat = jnp.pad(flat, (0, pad_elems))
    rows = flat.shape[0] // lane

    # Tile the row axis: small inputs use a single full-array block; large
    # inputs get fixed 2 MiB tiles (rows padded to a whole number of tiles).
    if rows <= tile_rows:
        tr = rows
    else:
        tr = tile_rows
        pad_rows = (-rows) % tr
        if pad_rows:
            flat = jnp.pad(flat, (0, pad_rows * lane))
            rows += pad_rows
    num_tiles = rows // tr
    x2d = flat.reshape(rows, lane)

    w_s = weight.reshape(1).astype(x2d.dtype)
    b_s = bias.reshape(1).astype(x2d.dtype)

    out2d = pl.pallas_call(
        _pixelcnn_kernel,
        out_shape=jax.ShapeDtypeStruct((rows, lane), x2d.dtype),
        grid_spec=pl.GridSpec(
            grid=(num_tiles,),
            in_specs=[
                pl.BlockSpec(memory_space=pltpu.MemorySpace.SMEM),   # weight
                pl.BlockSpec(memory_space=pltpu.MemorySpace.SMEM),   # bias
                pl.BlockSpec((tr, lane), lambda i: (i, 0)),          # x tile
            ],
            out_specs=pl.BlockSpec((tr, lane), lambda i: (i, 0)),
        ),
        compiler_params=pltpu.CompilerParams(
            dimension_semantics=("parallel",),   # megacore sharding on v7x
        ),
    )(w_s, b_s, x2d)

    return out2d.reshape(-1)[:total].reshape(N, C, H, W)


def reference_forward(x, weight, bias):
    # Pure-JAX reference for correctness check.
    w = weight.reshape(())
    b = bias.reshape(())
    return jax.nn.sigmoid(x) * w + b


if __name__ == "__main__":
    key = jax.random.PRNGKey(0)
    kx, kw, kb, kx2 = jax.random.split(key, 4)

    # Deterministic synthetic parameters (mimic PyTorch's uniform init scale
    # for a 1x1 conv with fan_in=1); not a checkpoint load.
    weight = jax.random.uniform(kw, (1, 1, 1, 1), minval=-1.0, maxval=1.0,
                                dtype=jnp.float32)
    bias = jax.random.uniform(kb, (1,), minval=-1.0, maxval=1.0,
                              dtype=jnp.float32)

    # Small shape consistent with the module: N=2, C=1, H=W=16.
    x = jax.random.normal(kx, (2, 1, 16, 16), dtype=jnp.float32)
    out = jax.block_until_ready(pixelcnn_forward(x, weight, bias))
    ref = reference_forward(x, weight, bias)
    assert out.shape == x.shape
    assert jnp.allclose(out, ref, atol=1e-5, rtol=1e-5), "mismatch (small)"

    # Larger input to exercise the multi-tile, double-buffered, parallel grid.
    x_big = jax.random.normal(kx2, (8, 1, 256, 512), dtype=jnp.float32)
    out_big = jax.block_until_ready(pixelcnn_forward(x_big, weight, bias))
    ref_big = reference_forward(x_big, weight, bias)
    assert out_big.shape == x_big.shape
    assert jnp.allclose(out_big, ref_big, atol=1e-5, rtol=1e-5), "mismatch (large)"

    print("KERNEL_OK")
</pallas_src>

<mosaic_0001>
module attributes {stable_mosaic.version = 11 : i64} {
  func.func @_pixelcnn_kernel(%arg0: i32, %arg1: memref<1xf32, #tpu.memory_space<smem>>, %arg2: memref<1xf32, #tpu.memory_space<smem>>, %arg3: memref<4x128xf32, #tpu.memory_space<vmem>>, %arg4: memref<4x128xf32, #tpu.memory_space<vmem>>) attributes {dimension_semantics = [#tpu.dimension_semantics<parallel>], iteration_bounds = array<i64: 1>, scalar_prefetch = 0 : i64, scratch_operands = 0 : i64, tpu.core_type = #tpu.core_type<tc>, window_params = [{transform_indices = @transform_0, window_bounds = array<i64: 1>}, {transform_indices = @transform_1, window_bounds = array<i64: 1>}, {transform_indices = @transform_2, window_bounds = array<i64: 4, 128>}, {transform_indices = @transform_3, window_bounds = array<i64: 4, 128>}]} {
    %c0 = arith.constant 0 : index
    %0 = memref.load %arg1[%c0] : memref<1xf32, #tpu.memory_space<smem>>
    %c0_0 = arith.constant 0 : index
    %1 = memref.load %arg2[%c0_0] : memref<1xf32, #tpu.memory_space<smem>>
    %c0_1 = arith.constant 0 : index
    %c0_2 = arith.constant 0 : index
    %2 = vector.load %arg3[%c0_1, %c0_2] : memref<4x128xf32, #tpu.memory_space<vmem>>, vector<4x128xf32>
    %cst = arith.constant 0.000000e+00 : f32
    %3 = vector.broadcast %cst : f32 to vector<4x128xf32>
    %4 = arith.subf %3, %2 : vector<4x128xf32>
    %5 = math.exp %4 : vector<4x128xf32>
    %cst_3 = arith.constant 1.000000e+00 : f32
    %6 = vector.broadcast %cst_3 : f32 to vector<4x128xf32>
    %7 = arith.addf %6, %5 : vector<4x128xf32>
    %cst_4 = arith.constant 1.000000e+00 : f32
    %8 = vector.broadcast %cst_4 : f32 to vector<4x128xf32>
    %9 = arith.divf %8, %7 : vector<4x128xf32>
    %10 = vector.broadcast %0 : f32 to vector<4x128xf32>
    %11 = arith.mulf %9, %10 : vector<4x128xf32>
    %12 = vector.broadcast %1 : f32 to vector<4x128xf32>
    %13 = arith.addf %11, %12 : vector<4x128xf32>
    %c0_5 = arith.constant 0 : index
    %c0_6 = arith.constant 0 : index
    %14 = vector.load %arg4[%c0_5, %c0_6] : memref<4x128xf32, #tpu.memory_space<vmem>>, vector<4x128xf32>
    tpu.vector_store %arg4[%c0_5, %c0_6], %13 {strides = array<i32>} : memref<4x128xf32, #tpu.memory_space<vmem>>, vector<4x128xf32>,
    return
  }
  func.func @transform_0(%arg0: i32) -> i32 {
    %c0_i32 = arith.constant 0 : i32
    %c0_i32_0 = arith.constant 0 : i32
    return %c0_i32 : i32
  }
  func.func @transform_1(%arg0: i32) -> i32 {
    %c0_i32 = arith.constant 0 : i32
    %c0_i32_0 = arith.constant 0 : i32
    return %c0_i32 : i32
  }
  func.func @transform_2(%arg0: i32) -> (i32, i32) {
    %c0_i32 = arith.constant 0 : i32
    %c0_i32_0 = arith.constant 0 : i32
    return %arg0, %c0_i32 : i32, i32
  }
  func.func @transform_3(%arg0: i32) -> (i32, i32) {
    %c0_i32 = arith.constant 0 : i32
    %c0_i32_0 = arith.constant 0 : i32
    return %arg0, %c0_i32 : i32, i32
  }
}

</mosaic_0001>

<llo_original>
// kernel: tpu_custom_call.1
$region0: #{tpu_custom_call.1}
  #allocation0 [shape = 'u32[]', space=smem, size = 0x4, offset = 0x4, fixed_abs, tag = 'smem constant byte address 0x4 - core index']
  #allocation1 [shape = 'u32[144,128]{1,0:T(1,128)}', space=vmem, size = 0x12000, scoped, tag = 'internal scratch']
  #allocation2 [shape = 'f32[1]{0:T(128)S(6)}', space=smem, size = 0x200, scoped, tag = 'scoped memory for tpu_custom_call.1']
  #allocation3 [shape = 'f32[1]{0:T(128)S(6)}', space=smem, size = 0x200, scoped, tag = 'scoped memory for tpu_custom_call.1']
  %s0 = inlined_call_operand.<no memory space> [shape: f32[1], index: 0, kind: input, shape index: {}]
  %s1 = inlined_call_operand.<no memory space> [shape: f32[1], index: 1, kind: input, shape index: {}]
  %s2 = inlined_call_operand.vmem [shape: f32[4,128], index: 2, kind: input, shape index: {}]
  %s3 = inlined_call_operand.hbm [shape: f32[4,128], index: 3, kind: output, shape index: {}]
  %s4 = sld [smem:[#allocation0]]
  $region22: #{tpu_custom_call.1} parent=0
    _
  %s6 = ssub.s32 1, %s4
  %s7 = scalar_select 0, %s6, %s4
  %8 = sst [smem:[#allocation2]] %s0
  %9 = sst [smem:[#allocation3]] %s1
  $region1: #{tpu_custom_call.1} parent=0
    #allocation4 [shape = 'u8[2048]{0}', space=vmem, size = 0x800, scoped, tag = 'output window, operand 0, single buffered']
    #allocation5 [shape = 's32[1]{0}', space=sflag, size = 0x4, scoped, tag = 'scoped memory for tpu_custom_call.1']
    %10 = vsyncpa [#allocation5], 0
    // Predicated region
    $region2: #{tpu_custom_call.1} parent=1 // pred_check
      _
    $region3: #{tpu_custom_call.1} parent=1 // pred_check_branch
      %12 = sbr.rel (0) target = $region5
    $region4: #{tpu_custom_call.1} parent=1 // pred_region
      _
    $region5: #{tpu_custom_call.1} parent=1 // pred_fallthru
      _
    // Predicated region
    $region6: #{tpu_custom_call.1} parent=1 // pred_check
      _
    $region7: #{tpu_custom_call.1} parent=1 // pred_check_branch
      %14 = sbr.rel (0) target = $region9
    $region8: #{tpu_custom_call.1} parent=1 // pred_region
      _
    $region9: #{tpu_custom_call.1} parent=1 // pred_fallthru
      _
    // Predicated region
    $region10: #{tpu_custom_call.1} parent=1 // pred_check
      _
    $region11: #{tpu_custom_call.1} parent=1 // pred_check_branch
      %16 = sbr.rel (0) target = $region13
    $region12: #{tpu_custom_call.1} parent=1 // pred_region
      _
    $region13: #{tpu_custom_call.1} parent=1 // pred_fallthru
      _
    %s17 = sld [smem:[#allocation2]]
    %s18 = sld [smem:[#allocation3]]
    %v19 = vld [vmem:[%s2] sm:$0xf]
    %v20 = vsub.f32 0.0, %v19
    %v21 = vmul.f32 %v20, 1.442695
    %v22 = vpow.pop %v21
    %v23 = vadd.f32 %v22, 1.0
    %v24 = vrcp.pop %v23
    %v25 = vmul.f32 1.0, %v24
    %v26 = vstv %s17
    %v27 = vmul.f32 %v25, %v26
    %v28 = vstv %s18
    %v29 = vadd.f32 %v27, %v28
    %30 = vst [vmem:[#allocation4] sm:$0xf] %v29
    // Predicated region
    $region14: #{tpu_custom_call.1} parent=1 // pred_check
      _
    $region15: #{tpu_custom_call.1} parent=1 // pred_check_branch
      %32 = sbr.rel (0) target = $region17
    $region16: #{tpu_custom_call.1} parent=1 // pred_region
      %s34 = ssub.s32 64, 64
      %35 = vsyncadd [#allocation5], %s34
      %s37 = sshll.u32 [#allocation4], 4
      %s38 = int_to_ptr.vmem [resolvable:$true] %s37
      %40 = dma.vmem_to_hbm [thread:$0]  %s38, 64, %s3, [#allocation5]
    $region17: #{tpu_custom_call.1} parent=1 // pred_fallthru
      _
    // Predicated region
    $region18: #{tpu_custom_call.1} parent=1 // pred_check
      _
    $region19: #{tpu_custom_call.1} parent=1 // pred_check_branch
      %42 = sbr.rel (0) target = $region21
    $region20: #{tpu_custom_call.1} parent=1 // pred_region
      %43 = dma.done [#allocation5], 64
    $region21: #{tpu_custom_call.1} parent=1 // pred_fallthru
      _
    %44 = vsyncpa [#allocation5], 1

</llo_original>
